<compile_context>
chip_gen: v5e
topology: v5e:2x2
jax: 0.10.0
libtpu: 0.0.40
codegen_flags: <defaults>
</compile_context>

<pallas_src>
import functools

import jax
import jax.numpy as jnp
from jax.experimental import pallas as pl
from jax.experimental.pallas import tpu as pltpu


def _cdiv(a, b):
    return -(-a // b)


def _round_up(a, b):
    return _cdiv(a, b) * b


def _ce_dice_kernel(x_ref, t_ref, ce_ref, inter_ref, union_ref,
                    ce_acc, i_acc, u_acc, *, hw, n_s, s_tile, has_pad):
    """Grid point (n, p, s): x_ref/t_ref are (C, s_tile, 128) tiles.

    ce_ref:    (1, 1)       per-(n,p) CE partial sum (written once, at s == n_s-1)
    inter_ref: (C, 1, 1)    per-(n,p) per-class sum(pred*t)
    union_ref: (C, 1, 1)    per-(n,p) per-class sum(pred) + sum(t)
    """
    s = pl.program_id(2)

    @pl.when(s == 0)
    def _():
        ce_acc[...] = jnp.zeros_like(ce_acc)
        i_acc[...] = jnp.zeros_like(i_acc)
        u_acc[...] = jnp.zeros_like(u_acc)

    # Upcast the VMEM tile only (HBM keeps the native dtype, e.g. bf16).
    x = x_ref[...].astype(jnp.float32)      # (C, s_tile, 128)
    t = t_ref[...].astype(jnp.float32)      # (C, s_tile, 128)

    # Softmax over the class axis: C is a *leading* (non-tiled) dim, so these
    # reductions are elementwise combines of dense (s_tile, 128) planes (VALU only).
    m = jnp.max(x, axis=0)                  # (s_tile, 128)
    xm = x - m[None]                        # (C, s_tile, 128)
    e = jnp.exp(xm)                         # EUP
    se = jnp.sum(e, axis=0)                 # (s_tile, 128)
    inv_se = pl.reciprocal(se)              # EUP, exact
    log_se = jnp.log(se)                    # EUP
    pred = e * inv_se[None]                 # (C, s_tile, 128)

    if has_pad:
        # Zero the padded pixels' softmax so they don't contribute to sum(pred).
        # (Padded targets are already zero, so CE / intersection need no masking.)
        p = pl.program_id(1)
        row0 = (p * n_s + s) * s_tile
        sub = jax.lax.broadcasted_iota(jnp.int32, (s_tile, 128), 0)
        lane = jax.lax.broadcasted_iota(jnp.int32, (s_tile, 128), 1)
        pix = (row0 + sub) * 128 + lane
        valid = (pix < hw).astype(jnp.float32)      # (s_tile, 128)
        pred = pred * valid[None]

    # Cross entropy with probability targets, per pixel, without materializing logp:
    #   -sum_c t*logp = (sum_c t) * log(se) - sum_c t*(x - m)
    t_c = jnp.sum(t, axis=0)                                    # (s_tile, 128)
    ce_acc[...] += t_c * log_se - jnp.sum(t * xm, axis=0)       # lane-parallel accumulate

    # Dice partial sums: keep them elementwise (tile-shaped) — no per-tile XLU reduce.
    i_acc[...] += pred * t
    u_acc[...] += pred + t

    @pl.when(s == n_s - 1)
    def _():
        # Collapse the deferred spatial reductions once per (n, p).
        ce_ref[...] = jnp.sum(ce_acc[...], keepdims=True)                       # (1, 1)
        inter_ref[...] = jnp.sum(jnp.sum(i_acc[...], axis=2, keepdims=True),
                                 axis=1, keepdims=True)                         # (C, 1, 1)
        union_ref[...] = jnp.sum(jnp.sum(u_acc[...], axis=2, keepdims=True),
                                 axis=1, keepdims=True)                         # (C, 1, 1)


def _per_row_vmem_bytes(n_classes, itemsize):
    """Per-step VMEM bytes per 128-lane row of the tile.

    2 inputs x 2 pipeline buffers x itemsize, ~6 live f32 temporaries per class element
    (x, t, xm, e, pred, products), 2 f32 per-class scratch accumulators, plus ~8
    class-independent f32 (s_tile, 128) values (m, se, inv, log, t_c, ce_acc, mask, ...).
    """
    return 128 * (n_classes * (2 * 2 * itemsize + 6 * 4 + 2 * 4) + 8 * 4)


def _choose_tiling(hw, n_classes, itemsize, batch, sublane_tile=None,
                   spatial_splits=None, vmem_budget_bytes=12 * 1024 * 1024):
    """Pick (s_tile, P, n_s, s_total_rows) with footprint-aware tile sizing."""
    s_rows = _cdiv(hw, 128)                       # number of 128-lane rows needed
    if spatial_splits is None:
        p = 2 if batch == 1 else 1                # expose parallel work for v7x's 2 TCs
    else:
        p = int(spatial_splits)
    chunk = _round_up(_cdiv(s_rows, p), 8)        # rows per parallel chunk, sublane-aligned
    if sublane_tile is not None:
        if sublane_tile % 8 != 0:
            raise ValueError("sublane_tile must be a multiple of 8")
        cap = sublane_tile
    else:
        per_row = _per_row_vmem_bytes(n_classes, itemsize)
        cap = max(8, min(1024, (vmem_budget_bytes // per_row) // 8 * 8))
    n_s = max(1, _cdiv(chunk, cap))               # arbitrary (reduction) steps per chunk
    s_tile = _round_up(_cdiv(chunk, n_s), 8)      # balanced tile => minimal padding
    s_total = p * n_s * s_tile
    return s_tile, p, n_s, s_total


def ce_dice_loss(x_nchw, t_nchw, smooth=1.0, sublane_tile=None, spatial_splits=None):
    if x_nchw.shape != t_nchw.shape:
        raise ValueError(
            f"Input size ({x_nchw.shape}) must match target size ({t_nchw.shape})")
    N, C, H, W = x_nchw.shape
    HW = H * W
    itemsize = max(jnp.dtype(x_nchw.dtype).itemsize, jnp.dtype(t_nchw.dtype).itemsize)

    S_tile, P, n_s, S_total = _choose_tiling(
        HW, C, itemsize, N, sublane_tile=sublane_tile, spatial_splits=spatial_splits)
    HW_pad = S_total * 128
    has_pad = HW_pad != HW

    # Re-layout to (N, C, S_total, 128): spatial axis is lane-dense regardless of C.
    x = x_nchw.reshape(N, C, HW)
    t = t_nchw.reshape(N, C, HW)
    if has_pad:
        pad = ((0, 0), (0, 0), (0, HW_pad - HW))
        x = jnp.pad(x, pad)
        t = jnp.pad(t, pad)
    x = x.reshape(N, C, S_total, 128)
    t = t.reshape(N, C, S_total, 128)

    kernel = functools.partial(_ce_dice_kernel, hw=HW, n_s=n_s, s_tile=S_tile,
                               has_pad=has_pad)

    def in_map(n, p, s):
        return (n, 0, p * n_s + s, 0)

    in_specs = [pl.BlockSpec((None, C, S_tile, 128), in_map),
                pl.BlockSpec((None, C, S_tile, 128), in_map)]
    out_specs = [
        pl.BlockSpec((None, None, 1, 1), lambda n, p, s: (n, p, 0, 0)),
        pl.BlockSpec((None, None, C, 1, 1), lambda n, p, s: (n, p, 0, 0, 0)),
        pl.BlockSpec((None, None, C, 1, 1), lambda n, p, s: (n, p, 0, 0, 0)),
    ]
    out_shape = (
        jax.ShapeDtypeStruct((N, P, 1, 1), jnp.float32),     # CE partial sums
        jax.ShapeDtypeStruct((N, P, C, 1, 1), jnp.float32),  # per-class intersection
        jax.ShapeDtypeStruct((N, P, C, 1, 1), jnp.float32),  # per-class union
    )

    # Footprint-aware VMEM limit: keep >=32 MiB (v5e scoped default is 16 MiB),
    # but cap at 48 MiB so we stay within v7x's 64 MiB physical VMEM.
    est_vmem = S_tile * _per_row_vmem_bytes(C, itemsize)
    vmem_limit = int(min(48 * 1024 * 1024, max(32 * 1024 * 1024, est_vmem * 3 // 2)))

    bytes_in = int(x.size) * x.dtype.itemsize + int(t.size) * t.dtype.itemsize
    cost = pl.CostEstimate(
        flops=12 * N * C * HW_pad,
        transcendentals=N * HW_pad * (C + 2),
        bytes_accessed=bytes_in + N * P * (2 * C + 1) * 4)

    ce_p, inter_p, union_p = pl.pallas_call(
        kernel,
        out_shape=out_shape,
        grid_spec=pltpu.PrefetchScalarGridSpec(
            num_scalar_prefetch=0,
            grid=(N, P, n_s),
            in_specs=in_specs,
            out_specs=out_specs,
            scratch_shapes=[
                pltpu.VMEM((S_tile, 128), jnp.float32),      # CE accumulator (lane-parallel)
                pltpu.VMEM((C, S_tile, 128), jnp.float32),   # intersection accumulator
                pltpu.VMEM((C, S_tile, 128), jnp.float32),   # union accumulator
            ]),
        compiler_params=pltpu.CompilerParams(
            dimension_semantics=("parallel", "parallel", "arbitrary"),
            vmem_limit_bytes=vmem_limit),
        cost_estimate=cost,
    )(x, t)

    # Tiny finalization in the wrapper (combines spatial-parallel chunks).
    ce = jnp.sum(ce_p) / (N * HW)
    inter = jnp.sum(inter_p[:, :, :, 0, 0], axis=1)          # (N, C)
    union = jnp.sum(union_p[:, :, :, 0, 0], axis=1)          # (N, C)
    dice_loss = 1.0 - (2.0 * inter + smooth) / (union + smooth)
    return ce + jnp.mean(dice_loss)


def ce_dice_loss_ref(x, t, smooth=1.0):
    """Pure-JAX reference mirroring the PyTorch module (weight=None, reduction='mean')."""
    logp = jax.nn.log_softmax(x, axis=1)
    ce = -jnp.mean(jnp.sum(t * logp, axis=1))
    pred = jax.nn.softmax(x, axis=1)
    inter = jnp.sum(pred * t, axis=(2, 3))
    union = jnp.sum(pred, axis=(2, 3)) + jnp.sum(t, axis=(2, 3))
    dice = 1.0 - (2.0 * inter + smooth) / (union + smooth)
    return ce + jnp.mean(dice)


if __name__ == "__main__":
    key = jax.random.PRNGKey(0)
    k1, k2, k3, k4 = jax.random.split(key, 4)

    # Case 1: N=2, C=4, 16x16, float32 (HW=256 -> padded to one dense 8x128 tile).
    x = jax.random.normal(k1, (2, 4, 16, 16), dtype=jnp.float32)
    t = jax.nn.softmax(jax.random.normal(k2, (2, 4, 16, 16), dtype=jnp.float32), axis=1)
    ref = jax.block_until_ready(ce_dice_loss_ref(x, t, smooth=1.0))
    out = jax.block_until_ready(ce_dice_loss(x, t, smooth=1.0))
    assert jnp.allclose(out, ref, atol=1e-4, rtol=1e-4), (out, ref)

    # Forced spatial-parallel split (v7x two-TensorCore path, includes an all-pad chunk).
    out_p = jax.block_until_ready(ce_dice_loss(x, t, smooth=1.0, spatial_splits=2))
    assert jnp.allclose(out_p, ref, atol=1e-4, rtol=1e-4), (out_p, ref)

    # Case 2: C=3, 48x48 (HW=2304, not a multiple of 128): multi-step spatial
    # accumulation (3 tiles of 8 sublanes) + masked padded tail.
    x2 = jax.random.normal(k3, (2, 3, 48, 48), dtype=jnp.float32)
    t2 = jax.nn.softmax(jax.random.normal(k4, (2, 3, 48, 48), dtype=jnp.float32), axis=1)
    ref2 = jax.block_until_ready(ce_dice_loss_ref(x2, t2, smooth=1.0))
    out2 = jax.block_until_ready(ce_dice_loss(x2, t2, smooth=1.0, sublane_tile=8))
    assert jnp.allclose(out2, ref2, atol=1e-4, rtol=1e-4), (out2, ref2)

    # Case 3: bf16 HBM passthrough (native dtype in HBM, f32 upcast on the VMEM tile).
    xb = x.astype(jnp.bfloat16)
    tb = t.astype(jnp.bfloat16)
    ref_bf = jax.block_until_ready(
        ce_dice_loss_ref(xb.astype(jnp.float32), tb.astype(jnp.float32), smooth=1.0))
    out_bf = jax.block_until_ready(ce_dice_loss(xb, tb, smooth=1.0))
    assert jnp.allclose(out_bf, ref_bf, atol=1e-4, rtol=1e-4), (out_bf, ref_bf)

    # TODO(synk): the integer-label (3-D target) one_hot branch, per-class `weight`
    # rescaling and reduction='sum'/'none' are not implemented (module defaults:
    # weight=None, reduction='mean', float 4-D probability targets). bf16 product
    # streams on v6e/v7x are also left f32 to stay inside the 1e-4 tolerance.
    print("KERNEL_OK")
</pallas_src>

<mosaic_0001>
module attributes {stable_mosaic.version = 11 : i64} {
  func.func @_ce_dice_kernel(%arg0: i32, %arg1: i32, %arg2: i32, %arg3: memref<1x4x8x128xf32, #tpu.memory_space<vmem>>, %arg4: memref<1x4x8x128xf32, #tpu.memory_space<vmem>>, %arg5: memref<1x1x1x1xf32, #tpu.memory_space<vmem>>, %arg6: memref<1x1x4x1x1xf32, #tpu.memory_space<vmem>>, %arg7: memref<1x1x4x1x1xf32, #tpu.memory_space<vmem>>, %arg8: memref<8x128xf32, #tpu.memory_space<vmem>>, %arg9: memref<4x8x128xf32, #tpu.memory_space<vmem>>, %arg10: memref<4x8x128xf32, #tpu.memory_space<vmem>>) attributes {dimension_semantics = [#tpu.dimension_semantics<parallel>, #tpu.dimension_semantics<parallel>, #tpu.dimension_semantics<arbitrary>], iteration_bounds = array<i64: 2, 1, 1>, scalar_prefetch = 0 : i64, scratch_operands = 3 : i64, tpu.core_type = #tpu.core_type<tc>, window_params = [{transform_indices = @transform_0, window_bounds = array<i64: 1, 4, 8, 128>}, {transform_indices = @transform_1, window_bounds = array<i64: 1, 4, 8, 128>}, {transform_indices = @transform_2, window_bounds = array<i64: 1, 1, 1, 1>}, {transform_indices = @transform_3, window_bounds = array<i64: 1, 1, 4, 1, 1>}, {transform_indices = @transform_4, window_bounds = array<i64: 1, 1, 4, 1, 1>}]} {
    %c0_i32 = arith.constant 0 : i32
    %0 = arith.cmpi eq, %arg2, %c0_i32 : i32
    %1 = arith.extui %0 : i1 to i32
    %c0_i32_0 = arith.constant 0 : i32
    %2 = arith.cmpi ne, %1, %c0_i32_0 : i32
    scf.if %2 {
      %cst_29 = arith.constant 0.000000e+00 : f32
      %54 = vector.broadcast %cst_29 : f32 to vector<8x128xf32>
      %c0_30 = arith.constant 0 : index
      %c0_31 = arith.constant 0 : index
      %55 = vector.load %arg8[%c0_30, %c0_31] : memref<8x128xf32, #tpu.memory_space<vmem>>, vector<8x128xf32>
      tpu.vector_store %arg8[%c0_30, %c0_31], %54 {strides = array<i32>} : memref<8x128xf32, #tpu.memory_space<vmem>>, vector<8x128xf32>,
      %cst_32 = arith.constant 0.000000e+00 : f32
      %56 = vector.broadcast %cst_32 : f32 to vector<4x8x128xf32>
      %c0_33 = arith.constant 0 : index
      %c0_34 = arith.constant 0 : index
      %c0_35 = arith.constant 0 : index
      %57 = vector.load %arg9[%c0_33, %c0_34, %c0_35] : memref<4x8x128xf32, #tpu.memory_space<vmem>>, vector<4x8x128xf32>
      tpu.vector_store %arg9[%c0_33, %c0_34, %c0_35], %56 {strides = array<i32>} : memref<4x8x128xf32, #tpu.memory_space<vmem>>, vector<4x8x128xf32>,
      %cst_36 = arith.constant 0.000000e+00 : f32
      %58 = vector.broadcast %cst_36 : f32 to vector<4x8x128xf32>
      %c0_37 = arith.constant 0 : index
      %c0_38 = arith.constant 0 : index
      %c0_39 = arith.constant 0 : index
      %59 = vector.load %arg10[%c0_37, %c0_38, %c0_39] : memref<4x8x128xf32, #tpu.memory_space<vmem>>, vector<4x8x128xf32>
      tpu.vector_store %arg10[%c0_37, %c0_38, %c0_39], %58 {strides = array<i32>} : memref<4x8x128xf32, #tpu.memory_space<vmem>>, vector<4x8x128xf32>,
    } else {
    }
    %c0 = arith.constant 0 : index
    %c0_1 = arith.constant 0 : index
    %c0_2 = arith.constant 0 : index
    %c0_3 = arith.constant 0 : index
    %3 = vector.load %arg3[%c0, %c0_1, %c0_2, %c0_3] : memref<1x4x8x128xf32, #tpu.memory_space<vmem>>, vector<1x4x8x128xf32>
    %4 = vector.shape_cast %3 : vector<1x4x8x128xf32> to vector<4x8x128xf32>
    %c0_4 = arith.constant 0 : index
    %c0_5 = arith.constant 0 : index
    %c0_6 = arith.constant 0 : index
    %c0_7 = arith.constant 0 : index
    %5 = vector.load %arg4[%c0_4, %c0_5, %c0_6, %c0_7] : memref<1x4x8x128xf32, #tpu.memory_space<vmem>>, vector<1x4x8x128xf32>
    %6 = vector.shape_cast %5 : vector<1x4x8x128xf32> to vector<4x8x128xf32>
    %cst = arith.constant dense<0xFF800000> : vector<8x128xf32>
    %7 = vector.multi_reduction <maximumf>, %4, %cst [0] : vector<4x8x128xf32> to vector<8x128xf32>
    %8 = vector.shape_cast %7 : vector<8x128xf32> to vector<1x8x128xf32>
    %9 = vector.broadcast %8 : vector<1x8x128xf32> to vector<4x8x128xf32>
    %10 = arith.subf %4, %9 : vector<4x8x128xf32>
    %11 = math.exp %10 : vector<4x8x128xf32>
    %cst_8 = arith.constant dense<0.000000e+00> : vector<8x128xf32>
    %12 = vector.multi_reduction <add>, %11, %cst_8 [0] : vector<4x8x128xf32> to vector<8x128xf32>
    %13 = tpu.reciprocal %12 : vector<8x128xf32> -> vector<8x128xf32>
    %14 = math.log %12 : vector<8x128xf32>
    %15 = vector.shape_cast %13 : vector<8x128xf32> to vector<1x8x128xf32>
    %16 = vector.broadcast %15 : vector<1x8x128xf32> to vector<4x8x128xf32>
    %17 = arith.mulf %11, %16 : vector<4x8x128xf32>
    %c1_i32 = arith.constant 1 : i32
    %18 = arith.muli %arg1, %c1_i32 : i32
    %19 = arith.addi %18, %arg2 : i32
    %c8_i32 = arith.constant 8 : i32
    %20 = arith.muli %19, %c8_i32 : i32
    %21 = tpu.iota {dimensions = array<i32: 0>} : vector<8x128xi32>
    %22 = tpu.iota {dimensions = array<i32: 1>} : vector<8x128xi32>
    %23 = vector.broadcast %20 : i32 to vector<8x128xi32>
    %24 = arith.addi %23, %21 : vector<8x128xi32>
    %c128_i32 = arith.constant 128 : i32
    %25 = vector.broadcast %c128_i32 : i32 to vector<8x128xi32>
    %26 = arith.muli %24, %25 : vector<8x128xi32>
    %27 = arith.addi %26, %22 : vector<8x128xi32>
    %c256_i32 = arith.constant 256 : i32
    %28 = vector.broadcast %c256_i32 : i32 to vector<8x128xi32>
    %29 = arith.cmpi slt, %27, %28 : vector<8x128xi32>
    %30 = arith.extui %29 : vector<8x128xi1> to vector<8x128xi32>
    %31 = arith.sitofp %30 : vector<8x128xi32> to vector<8x128xf32>
    %32 = vector.shape_cast %31 : vector<8x128xf32> to vector<1x8x128xf32>
    %33 = vector.broadcast %32 : vector<1x8x128xf32> to vector<4x8x128xf32>
    %34 = arith.mulf %17, %33 : vector<4x8x128xf32>
    %cst_9 = arith.constant dense<0.000000e+00> : vector<8x128xf32>
    %35 = vector.multi_reduction <add>, %6, %cst_9 [0] : vector<4x8x128xf32> to vector<8x128xf32>
    %c0_10 = arith.constant 0 : index
    %c0_11 = arith.constant 0 : index
    %36 = vector.load %arg8[%c0_10, %c0_11] : memref<8x128xf32, #tpu.memory_space<vmem>>, vector<8x128xf32>
    %37 = arith.mulf %35, %14 : vector<8x128xf32>
    %38 = arith.mulf %6, %10 : vector<4x8x128xf32>
    %cst_12 = arith.constant dense<0.000000e+00> : vector<8x128xf32>
    %39 = vector.multi_reduction <add>, %38, %cst_12 [0] : vector<4x8x128xf32> to vector<8x128xf32>
    %40 = arith.subf %37, %39 : vector<8x128xf32>
    %41 = arith.addf %36, %40 : vector<8x128xf32>
    %c0_13 = arith.constant 0 : index
    %c0_14 = arith.constant 0 : index
    %42 = vector.load %arg8[%c0_13, %c0_14] : memref<8x128xf32, #tpu.memory_space<vmem>>, vector<8x128xf32>
    tpu.vector_store %arg8[%c0_13, %c0_14], %41 {strides = array<i32>} : memref<8x128xf32, #tpu.memory_space<vmem>>, vector<8x128xf32>,
    %c0_15 = arith.constant 0 : index
    %c0_16 = arith.constant 0 : index
    %c0_17 = arith.constant 0 : index
    %43 = vector.load %arg9[%c0_15, %c0_16, %c0_17] : memref<4x8x128xf32, #tpu.memory_space<vmem>>, vector<4x8x128xf32>
    %44 = arith.mulf %34, %6 : vector<4x8x128xf32>
    %45 = arith.addf %43, %44 : vector<4x8x128xf32>
    %c0_18 = arith.constant 0 : index
    %c0_19 = arith.constant 0 : index
    %c0_20 = arith.constant 0 : index
    %46 = vector.load %arg9[%c0_18, %c0_19, %c0_20] : memref<4x8x128xf32, #tpu.memory_space<vmem>>, vector<4x8x128xf32>
    tpu.vector_store %arg9[%c0_18, %c0_19, %c0_20], %45 {strides = array<i32>} : memref<4x8x128xf32, #tpu.memory_space<vmem>>, vector<4x8x128xf32>,
    %c0_21 = arith.constant 0 : index
    %c0_22 = arith.constant 0 : index
    %c0_23 = arith.constant 0 : index
    %47 = vector.load %arg10[%c0_21, %c0_22, %c0_23] : memref<4x8x128xf32, #tpu.memory_space<vmem>>, vector<4x8x128xf32>
    %48 = arith.addf %34, %6 : vector<4x8x128xf32>
    %49 = arith.addf %47, %48 : vector<4x8x128xf32>
    %c0_24 = arith.constant 0 : index
    %c0_25 = arith.constant 0 : index
    %c0_26 = arith.constant 0 : index
    %50 = vector.load %arg10[%c0_24, %c0_25, %c0_26] : memref<4x8x128xf32, #tpu.memory_space<vmem>>, vector<4x8x128xf32>
    tpu.vector_store %arg10[%c0_24, %c0_25, %c0_26], %49 {strides = array<i32>} : memref<4x8x128xf32, #tpu.memory_space<vmem>>, vector<4x8x128xf32>,
    %c0_i32_27 = arith.constant 0 : i32
    %51 = arith.cmpi eq, %arg2, %c0_i32_27 : i32
    %52 = arith.extui %51 : i1 to i32
    %c0_i32_28 = arith.constant 0 : i32
    %53 = arith.cmpi ne, %52, %c0_i32_28 : i32
    scf.if %53 {
      %c0_29 = arith.constant 0 : index
      %c0_30 = arith.constant 0 : index
      %54 = vector.load %arg8[%c0_29, %c0_30] : memref<8x128xf32, #tpu.memory_space<vmem>>, vector<8x128xf32>
      %55 = vector.shape_cast %54 : vector<8x128xf32> to vector<1x8x128xf32>
      %cst_31 = arith.constant dense<0.000000e+00> : vector<1xf32>
      %56 = vector.multi_reduction <add>, %55, %cst_31 [1, 2] : vector<1x8x128xf32> to vector<1xf32>
      %57 = vector.shape_cast %56 : vector<1xf32> to vector<1x1x1xf32>
      %58 = vector.extract %57[0, 0, 0] : f32 from vector<1x1x1xf32>
      %59 = vector.broadcast %58 : f32 to vector<1x1xf32>
      %c0_32 = arith.constant 0 : index
      %c0_33 = arith.constant 0 : index
      %c0_34 = arith.constant 0 : index
      %c0_35 = arith.constant 0 : index
      %60 = vector.load %arg5[%c0_32, %c0_33, %c0_34, %c0_35] : memref<1x1x1x1xf32, #tpu.memory_space<vmem>>, vector<1x1x1x1xf32>
      %61 = vector.shape_cast %60 : vector<1x1x1x1xf32> to vector<1x1xf32>
      %62 = vector.shape_cast %59 : vector<1x1xf32> to vector<1x1x1x1xf32>
      tpu.vector_store %arg5[%c0_32, %c0_33, %c0_34, %c0_35], %62 {strides = array<i32>} : memref<1x1x1x1xf32, #tpu.memory_space<vmem>>, vector<1x1x1x1xf32>,
      %c0_36 = arith.constant 0 : index
      %c0_37 = arith.constant 0 : index
      %c0_38 = arith.constant 0 : index
      %63 = vector.load %arg9[%c0_36, %c0_37, %c0_38] : memref<4x8x128xf32, #tpu.memory_space<vmem>>, vector<4x8x128xf32>
      %cst_39 = arith.constant dense<0.000000e+00> : vector<4x8xf32>
      %64 = vector.multi_reduction <add>, %63, %cst_39 [2] : vector<4x8x128xf32> to vector<4x8xf32>
      %65 = vector.shape_cast %64 : vector<4x8xf32> to vector<4x8x1xf32>
      %cst_40 = arith.constant dense<0.000000e+00> : vector<4x1xf32>
      %66 = vector.multi_reduction <add>, %65, %cst_40 [1] : vector<4x8x1xf32> to vector<4x1xf32>
      %67 = vector.shape_cast %66 : vector<4x1xf32> to vector<4x1x1xf32>
      %c0_41 = arith.constant 0 : index
      %c0_42 = arith.constant 0 : index
      %c0_43 = arith.constant 0 : index
      %c0_44 = arith.constant 0 : index
      %c0_45 = arith.constant 0 : index
      %68 = vector.load %arg6[%c0_41, %c0_42, %c0_43, %c0_44, %c0_45] : memref<1x1x4x1x1xf32, #tpu.memory_space<vmem>>, vector<1x1x4x1x1xf32>
      %69 = vector.shape_cast %68 : vector<1x1x4x1x1xf32> to vector<4x1x1xf32>
      %70 = vector.shape_cast %67 : vector<4x1x1xf32> to vector<1x1x4x1x1xf32>
      tpu.vector_store %arg6[%c0_41, %c0_42, %c0_43, %c0_44, %c0_45], %70 {strides = array<i32>} : memref<1x1x4x1x1xf32, #tpu.memory_space<vmem>>, vector<1x1x4x1x1xf32>,
      %c0_46 = arith.constant 0 : index
      %c0_47 = arith.constant 0 : index
      %c0_48 = arith.constant 0 : index
      %71 = vector.load %arg10[%c0_46, %c0_47, %c0_48] : memref<4x8x128xf32, #tpu.memory_space<vmem>>, vector<4x8x128xf32>
      %cst_49 = arith.constant dense<0.000000e+00> : vector<4x8xf32>
      %72 = vector.multi_reduction <add>, %71, %cst_49 [2] : vector<4x8x128xf32> to vector<4x8xf32>
      %73 = vector.shape_cast %72 : vector<4x8xf32> to vector<4x8x1xf32>
      %cst_50 = arith.constant dense<0.000000e+00> : vector<4x1xf32>
      %74 = vector.multi_reduction <add>, %73, %cst_50 [1] : vector<4x8x1xf32> to vector<4x1xf32>
      %75 = vector.shape_cast %74 : vector<4x1xf32> to vector<4x1x1xf32>
      %c0_51 = arith.constant 0 : index
      %c0_52 = arith.constant 0 : index
      %c0_53 = arith.constant 0 : index
      %c0_54 = arith.constant 0 : index
      %c0_55 = arith.constant 0 : index
      %76 = vector.load %arg7[%c0_51, %c0_52, %c0_53, %c0_54, %c0_55] : memref<1x1x4x1x1xf32, #tpu.memory_space<vmem>>, vector<1x1x4x1x1xf32>
      %77 = vector.shape_cast %76 : vector<1x1x4x1x1xf32> to vector<4x1x1xf32>
      %78 = vector.shape_cast %75 : vector<4x1x1xf32> to vector<1x1x4x1x1xf32>
      tpu.vector_store %arg7[%c0_51, %c0_52, %c0_53, %c0_54, %c0_55], %78 {strides = array<i32>} : memref<1x1x4x1x1xf32, #tpu.memory_space<vmem>>, vector<1x1x4x1x1xf32>,
    } else {
    }
    return
  }
  func.func @transform_0(%arg0: i32, %arg1: i32, %arg2: i32) -> (i32, i32, i32, i32) {
    %c1_i32 = arith.constant 1 : i32
    %0 = arith.muli %arg1, %c1_i32 : i32
    %1 = arith.addi %0, %arg2 : i32
    %c0_i32 = arith.constant 0 : i32
    %c0_i32_0 = arith.constant 0 : i32
    %c0_i32_1 = arith.constant 0 : i32
    return %arg0, %c0_i32, %1, %c0_i32_0 : i32, i32, i32, i32
  }
  func.func @transform_1(%arg0: i32, %arg1: i32, %arg2: i32) -> (i32, i32, i32, i32) {
    %c1_i32 = arith.constant 1 : i32
    %0 = arith.muli %arg1, %c1_i32 : i32
    %1 = arith.addi %0, %arg2 : i32
    %c0_i32 = arith.constant 0 : i32
    %c0_i32_0 = arith.constant 0 : i32
    %c0_i32_1 = arith.constant 0 : i32
    return %arg0, %c0_i32, %1, %c0_i32_0 : i32, i32, i32, i32
  }
  func.func @transform_2(%arg0: i32, %arg1: i32, %arg2: i32) -> (i32, i32, i32, i32) {
    %c0_i32 = arith.constant 0 : i32
    %c0_i32_0 = arith.constant 0 : i32
    %c0_i32_1 = arith.constant 0 : i32
    return %arg0, %arg1, %c0_i32, %c0_i32_0 : i32, i32, i32, i32
  }
  func.func @transform_3(%arg0: i32, %arg1: i32, %arg2: i32) -> (i32, i32, i32, i32, i32) {
    %c0_i32 = arith.constant 0 : i32
    %c0_i32_0 = arith.constant 0 : i32
    %c0_i32_1 = arith.constant 0 : i32
    %c0_i32_2 = arith.constant 0 : i32
    return %arg0, %arg1, %c0_i32, %c0_i32_0, %c0_i32_1 : i32, i32, i32, i32, i32
  }
  func.func @transform_4(%arg0: i32, %arg1: i32, %arg2: i32) -> (i32, i32, i32, i32, i32) {
    %c0_i32 = arith.constant 0 : i32
    %c0_i32_0 = arith.constant 0 : i32
    %c0_i32_1 = arith.constant 0 : i32
    %c0_i32_2 = arith.constant 0 : i32
    return %arg0, %arg1, %c0_i32, %c0_i32_0, %c0_i32_1 : i32, i32, i32, i32, i32
  }
}

</mosaic_0001>

<llo_original>
// kernel: tpu_custom_call.1
$region0: #{tpu_custom_call.1}
  #allocation0 [shape = 'u32[]', space=smem, size = 0x4, offset = 0x4, fixed_abs, tag = 'smem constant byte address 0x4 - core index']
  #allocation1 [shape = 'u32[72,128]{1,0:T(1,128)}', space=vmem, size = 0x9000, scoped, tag = 'internal scratch']
  #allocation2 [shape = 'f32[8,128]{1,0:T(8,128)}', space=vmem, size = 0x1000, scoped, tag = 'scratch operand']
  #allocation3 [shape = 'f32[4,8,128]{2,1,0:T(8,128)}', space=vmem, size = 0x4000, scoped, tag = 'scratch operand']
  #allocation4 [shape = 'f32[4,8,128]{2,1,0:T(8,128)}', space=vmem, size = 0x4000, scoped, tag = 'scratch operand']
  %s0 = inlined_call_operand.hbm [shape: f32[2,4,8,128], index: 0, kind: input, shape index: {}]
  %s1 = inlined_call_operand.hbm [shape: f32[2,4,8,128], index: 1, kind: input, shape index: {}]
  %s2 = inlined_call_operand.vmem [shape: f32[2,1,1,1], index: 2, kind: output, shape index: {0}]
  %s3 = inlined_call_operand.vmem [shape: f32[2,1,4,1,1], index: 3, kind: output, shape index: {1}]
  %s4 = inlined_call_operand.vmem [shape: f32[2,1,4,1,1], index: 4, kind: output, shape index: {2}]
  %5 = xla_tuple %s2, %s3, %s4
  %s6 = sld [smem:[#allocation0]]
  $region73: #{tpu_custom_call.1} parent=0
    _
  %s8 = ssub.s32 1, %s6
  %s9 = scalar_select 0, %s8, %s6
  $region1: #{tpu_custom_call.1} parent=0
    #allocation5 [shape = 'u8[32768]{0}', space=vmem, size = 0x8000, scoped, tag = 'input window, operand 0']
    #allocation6 [shape = 's32[2]{0}', space=sflag, size = 0x8, scoped, tag = 'scoped memory for tpu_custom_call.1']
    #allocation7 [shape = 'u8[32768]{0}', space=vmem, size = 0x8000, scoped, tag = 'input window, operand 1']
    #allocation8 [shape = 's32[2]{0}', space=sflag, size = 0x8, scoped, tag = 'scoped memory for tpu_custom_call.1']
    %10 = vsyncpa [#allocation6], 0
    %s11 = scalar_lea.sflag [#allocation6], 1
    %12 = vsyncpa %s11, 0
    %13 = vsyncpa [#allocation8], 0
    %s14 = scalar_lea.sflag [#allocation8], 1
    %15 = vsyncpa %s14, 0
    loop: start=0, step=1, limit=4
    $region2: #{tpu_custom_call.1} parent=1 // loop_pre_header
      _
    $region3: #{tpu_custom_call.1} parent=1 // loop_header
      %s17 = sphi 0, %s21
      %p18 = scmp.ge.s32.totalorder %s17, 4
      %s24 = sphi 0, %s43
      %s25 = sphi 0, %s39
      %s26 = sphi 0, %s35
      %s27 = sphi 0, %s24
      %s28 = sphi 0, %s25
      %s29 = sphi 0, %s26
      %s30 = sphi 0, %s27
      %s31 = sphi 0, %s28
      %s32 = sphi 0, %s29
      %s50 = sphi 0, %s52
      %s53 = sphi 0, %s50
      %s54 = sphi 0, %s53
      %s70 = sphi 0, %s54
      %s80 = sphi 0, %s82
      %s83 = sphi 0, %s80
      %s84 = sphi 0, %s83
      %s100 = sphi 0, %s84
      %s108 = sphi 0, %s110
      %s111 = sphi 0, %s108
      %s112 = sphi 0, %s111
      %s128 = sphi 0, %s112
      %s136 = sphi 0, %s138
      %s139 = sphi 0, %s136
      %s140 = sphi 0, %s139
      %s156 = sphi 0, %s140
      %s164 = sphi 0, %s166
      %s167 = sphi 0, %s164
      %s168 = sphi 0, %s167
      %s184 = sphi 0, %s168
    $region4: #{tpu_custom_call.1} parent=1 // loop_header_branch
      %20 = sbr.rel (%p18) target = $region8
    $region5: #{tpu_custom_call.1} parent=1 // loop_body
      %s22 = ssub.s32 %s17, 1
      %s23 = ssub.s32 %s17, 2
      %s33 = sadd.s32 1, %s26
      %p34 = scmp.ge.s32.totalorder %s33, 1
      %s35 = scalar_select %p34, 0, %s33
      %s36 = sadd.s32 1, %s25
      %s37 = scalar_select %p34, %s36, %s25
      %p38 = scmp.ge.s32.totalorder %s37, 1
      %s39 = scalar_select %p38, 0, %s37
      %s40 = sadd.s32 1, %s24
      %s41 = scalar_select %p38, %s40, %s24
      %p42 = scmp.ge.s32.totalorder %s41, 2
      %s43 = scalar_select %p42, 0, %s41
      %s44 = sadd.s32 %s25, %s26
      %s45 = sadd.s32 %s39, %s35
      %s46 = ssub.s32 %s24, %s43
      %s47 = ssub.s32 %s44, %s45
      %s48 = sor.u32 %s46, %s47
      %p49 = scmp.eq.s32.totalorder %s48, 0
      %s51 = sadd.s32 %s50, 1
      %s52 = scalar_select %p49, %s50, %s51
      %p55 = pneg %p49
      %p56 = scmp.eq.s32.totalorder %s17, 1
      %p57 = por %p55, %p56
      %p58 = scmp.ne.s32.totalorder %s50, %s53
      %p59 = scmp.eq.s32.totalorder %s17, 0
      %p60 = por %p58, %p59
      %p61 = scmp.ne.s32.totalorder %s50, %s53
      %p62 = scmp.eq.s32.totalorder %s22, 1
      %p63 = por %p61, %p62
      %p64 = scmp.ne.s32.totalorder %s53, %s54
      %p65 = scmp.eq.s32.totalorder %s22, 0
      %p66 = por %p64, %p65
      %p67 = scmp.ne.s32.totalorder %s53, %s54
      %p68 = scmp.eq.s32.totalorder %s23, 1
      %p69 = por %p67, %p68
      %p71 = scmp.ne.s32.totalorder %s54, %s70
      %p72 = scmp.eq.s32.totalorder %s23, 0
      %p73 = por %p71, %p72
      %s74 = sadd.s32 %s25, %s26
      %s75 = sadd.s32 %s39, %s35
      %s76 = ssub.s32 %s24, %s43
      %s77 = ssub.s32 %s74, %s75
      %s78 = sor.u32 %s76, %s77
      %p79 = scmp.eq.s32.totalorder %s78, 0
      %s81 = sadd.s32 %s80, 1
      %s82 = scalar_select %p79, %s80, %s81
      %p85 = pneg %p79
      %p86 = scmp.eq.s32.totalorder %s17, 1
      %p87 = por %p85, %p86
      %p88 = scmp.ne.s32.totalorder %s80, %s83
      %p89 = scmp.eq.s32.totalorder %s17, 0
      %p90 = por %p88, %p89
      %p91 = scmp.ne.s32.totalorder %s80, %s83
      %p92 = scmp.eq.s32.totalorder %s22, 1
      %p93 = por %p91, %p92
      %p94 = scmp.ne.s32.totalorder %s83, %s84
      %p95 = scmp.eq.s32.totalorder %s22, 0
      %p96 = por %p94, %p95
      %p97 = scmp.ne.s32.totalorder %s83, %s84
      %p98 = scmp.eq.s32.totalorder %s23, 1
      %p99 = por %p97, %p98
      %p101 = scmp.ne.s32.totalorder %s84, %s100
      %p102 = scmp.eq.s32.totalorder %s23, 0
      %p103 = por %p101, %p102
      %s104 = ssub.s32 %s24, %s43
      %s105 = ssub.s32 %s25, %s39
      %s106 = sor.u32 %s104, %s105
      %p107 = scmp.eq.s32.totalorder %s106, 0
      %s109 = sadd.s32 %s108, 1
      %s110 = scalar_select %p107, %s108, %s109
      %p113 = pneg %p107
      %p114 = scmp.eq.s32.totalorder %s17, 1
      %p115 = por %p113, %p114
      %p116 = scmp.ne.s32.totalorder %s108, %s111
      %p117 = scmp.eq.s32.totalorder %s17, 0
      %p118 = por %p116, %p117
      %p119 = scmp.ne.s32.totalorder %s108, %s111
      %p120 = scmp.eq.s32.totalorder %s22, 1
      %p121 = por %p119, %p120
      %p122 = scmp.ne.s32.totalorder %s111, %s112
      %p123 = scmp.eq.s32.totalorder %s22, 0
      %p124 = por %p122, %p123
      %p125 = scmp.ne.s32.totalorder %s111, %s112
      %p126 = scmp.eq.s32.totalorder %s23, 1
      %p127 = por %p125, %p126
      %p129 = scmp.ne.s32.totalorder %s112, %s128
      %p130 = scmp.eq.s32.totalorder %s23, 0
      %p131 = por %p129, %p130
      %s132 = ssub.s32 %s24, %s43
      %s133 = ssub.s32 %s25, %s39
      %s134 = sor.u32 %s132, %s133
      %p135 = scmp.eq.s32.totalorder %s134, 0
      %s137 = sadd.s32 %s136, 1
      %s138 = scalar_select %p135, %s136, %s137
      %p141 = pneg %p135
      %p142 = scmp.eq.s32.totalorder %s17, 1
      %p143 = por %p141, %p142
      %p144 = scmp.ne.s32.totalorder %s136, %s139
      %p145 = scmp.eq.s32.totalorder %s17, 0
      %p146 = por %p144, %p145
      %p147 = scmp.ne.s32.totalorder %s136, %s139
      %p148 = scmp.eq.s32.totalorder %s22, 1
      %p149 = por %p147, %p148
      %p150 = scmp.ne.s32.totalorder %s139, %s140
      %p151 = scmp.eq.s32.totalorder %s22, 0
      %p152 = por %p150, %p151
      %p153 = scmp.ne.s32.totalorder %s139, %s140
      %p154 = scmp.eq.s32.totalorder %s23, 1
      %p155 = por %p153, %p154
      %p157 = scmp.ne.s32.totalorder %s140, %s156
      %p158 = scmp.eq.s32.totalorder %s23, 0
      %p159 = por %p157, %p158
      %s160 = ssub.s32 %s24, %s43
      %s161 = ssub.s32 %s25, %s39
      %s162 = sor.u32 %s160, %s161
      %p163 = scmp.eq.s32.totalorder %s162, 0
      %s165 = sadd.s32 %s164, 1
      %s166 = scalar_select %p163, %s164, %s165
      %p169 = pneg %p163
      %p170 = scmp.eq.s32.totalorder %s17, 1
      %p171 = por %p169, %p170
      %p172 = scmp.ne.s32.totalorder %s164, %s167
      %p173 = scmp.eq.s32.totalorder %s17, 0
      %p174 = por %p172, %p173
      %p175 = scmp.ne.s32.totalorder %s164, %s167
      %p176 = scmp.eq.s32.totalorder %s22, 1
      %p177 = por %p175, %p176
      %p178 = scmp.ne.s32.totalorder %s167, %s168
      %p179 = scmp.eq.s32.totalorder %s22, 0
      %p180 = por %p178, %p179
      %p181 = scmp.ne.s32.totalorder %s167, %s168
      %p182 = scmp.eq.s32.totalorder %s23, 1
      %p183 = por %p181, %p182
      %p185 = scmp.ne.s32.totalorder %s168, %s184
      %p186 = scmp.eq.s32.totalorder %s23, 0
      %p187 = por %p185, %p186
      %p188 = scmp.le.s32.totalorder 1, %s17
      %p189 = scmp.lt.s32.totalorder %s17, 3
      %p190 = pnand %p188, %p189
      %p191 = pneg %p190
      // Predicated region
      $region9: #{tpu_custom_call.1} parent=5 // pred_check
        _
      $region10: #{tpu_custom_call.1} parent=5 // pred_check_branch
        %193 = sbr.rel (%p190) target = $region12
      $region11: #{tpu_custom_call.1} parent=5 // pred_region
        %s194 = ssub.s32 %s17, 1
      $region12: #{tpu_custom_call.1} parent=5 // pred_fallthru
        _
      %p195 = scmp.lt.s32.totalorder %s17, 2
      // Predicated region
      $region13: #{tpu_custom_call.1} parent=5 // pred_check
        %p196 = pneg %p195
      $region14: #{tpu_custom_call.1} parent=5 // pred_check_branch
        %198 = sbr.rel (%p196) target = $region16
      $region15: #{tpu_custom_call.1} parent=5 // pred_region
        // Predicated region
        $region17: #{tpu_custom_call.1} parent=15 // pred_check
          %p199 = pneg %p60
        $region18: #{tpu_custom_call.1} parent=15 // pred_check_branch
          %201 = sbr.rel (%p199) target = $region20
        $region19: #{tpu_custom_call.1} parent=15 // pred_region
          %s202 = sand.u32 %s50, 1
          %s203 = scalar_lea.sflag [#allocation6], %s202
          %s204 = sand.u32 %s50, 1
          %s205 = smul.addr %s204, 32
          %s206 = scalar_lea.vmem [#allocation5], %s205
          %s207 = sadd.s32 %s25, %s26
          %209 = vsyncadd %s203, 0
          %s210 = smul.addr %s24, 4
          %s211 = sadd.s32 %s207, %s210
          %s212 = smul.addr %s211, 8
          %s213 = scalar_lea.hbm %s0, %s212
          %s214 = sshll.u32 %s213, 4
          %s215 = int_to_ptr.hbm [resolvable:$true] %s214
          %s216 = sshll.u32 %s206, 4
          %s217 = int_to_ptr.vmem [resolvable:$true] %s216
          %222 = dma.hbm_to_vmem [thread:$0]  %s215, 512, %s217, %s203, 128, 128, 8
        $region20: #{tpu_custom_call.1} parent=15 // pred_fallthru
          _
        // Predicated region
        $region21: #{tpu_custom_call.1} parent=15 // pred_check
          %p223 = pneg %p90
        $region22: #{tpu_custom_call.1} parent=15 // pred_check_branch
          %225 = sbr.rel (%p223) target = $region24
        $region23: #{tpu_custom_call.1} parent=15 // pred_region
          %s226 = sand.u32 %s80, 1
          %s227 = scalar_lea.sflag [#allocation8], %s226
          %s228 = sand.u32 %s80, 1
          %s229 = smul.addr %s228, 32
          %s230 = scalar_lea.vmem [#allocation7], %s229
          %s231 = sadd.s32 %s25, %s26
          %233 = vsyncadd %s227, 0
          %s234 = smul.addr %s24, 4
          %s235 = sadd.s32 %s231, %s234
          %s236 = smul.addr %s235, 8
          %s237 = scalar_lea.hbm %s1, %s236
          %s238 = sshll.u32 %s237, 4
          %s239 = int_to_ptr.hbm [resolvable:$true] %s238
          %s240 = sshll.u32 %s230, 4
          %s241 = int_to_ptr.vmem [resolvable:$true] %s240
          %246 = dma.hbm_to_vmem [thread:$0]  %s239, 512, %s241, %s227, 128, 128, 8
        $region24: #{tpu_custom_call.1} parent=15 // pred_fallthru
          _
      $region16: #{tpu_custom_call.1} parent=5 // pred_fallthru
        _
      %p247 = scmp.le.s32.totalorder 1, %s17
      %p248 = scmp.lt.s32.totalorder %s17, 3
      %p249 = pnand %p247, %p248
      %p250 = pneg %p249
      // Predicated region
      $region25: #{tpu_custom_call.1} parent=5 // pred_check
        _
      $region26: #{tpu_custom_call.1} parent=5 // pred_check_branch
        %252 = sbr.rel (%p249) target = $region28
      $region27: #{tpu_custom_call.1} parent=5 // pred_region
        %s253 = ssub.s32 %s17, 1
        %s254 = sand.u32 %s53, 1
        %s255 = scalar_lea.sflag [#allocation6], %s254
        %s256 = sand.u32 %s53, 1
        %s257 = smul.addr %s256, 32
        %s258 = scalar_lea.vmem [#allocation5], %s257
        // Predicated region
        $region29: #{tpu_custom_call.1} parent=27 // pred_check
          %p259 = pneg %p66
        $region30: #{tpu_custom_call.1} parent=27 // pred_check_branch
          %261 = sbr.rel (%p259) target = $region32
        $region31: #{tpu_custom_call.1} parent=27 // pred_region
          %263 = dma.done %s255, 512
        $region32: #{tpu_custom_call.1} parent=27 // pred_fallthru
          _
        %s264 = sand.u32 %s83, 1
        %s265 = scalar_lea.sflag [#allocation8], %s264
        %s266 = sand.u32 %s83, 1
        %s267 = smul.addr %s266, 32
        %s268 = scalar_lea.vmem [#allocation7], %s267
        // Predicated region
        $region33: #{tpu_custom_call.1} parent=27 // pred_check
          %p269 = pneg %p96
        $region34: #{tpu_custom_call.1} parent=27 // pred_check_branch
          %271 = sbr.rel (%p269) target = $region36
        $region35: #{tpu_custom_call.1} parent=27 // pred_region
          %273 = dma.done %s265, 512
        $region36: #{tpu_custom_call.1} parent=27 // pred_fallthru
          _
        %s274 = sand.u32 %s53, 1
        %s275 = scalar_lea.sflag [#allocation6], %s274
        %s276 = sand.u32 %s53, 1
        %s277 = smul.addr %s276, 32
        %s278 = scalar_lea.vmem [#allocation5], %s277
        %p279 = pneg %p66
        %p280 = pneg %p63
        %s281 = sand.u32 %s83, 1
        %s282 = scalar_lea.sflag [#allocation8], %s281
        %s283 = sand.u32 %s83, 1
        %s284 = smul.addr %s283, 32
        %s285 = scalar_lea.vmem [#allocation7], %s284
        %p286 = pneg %p96
        %p287 = pneg %p93
        %p288 = pneg %p124
        %p289 = pneg %p121
        %p290 = scmp.lt.s32.totalorder %s27, 1
        %s291 = scalar_select %p290, %s27, 1
        %p292 = scmp.lt.s32.totalorder %s28, 0
        %s293 = scalar_select %p292, %s28, 0
        %s294 = sadd.s32 %s293, %s291
        %s295 = scalar_lea.vmem %s2, %s294
        %p296 = pneg %p152
        %p297 = pneg %p149
        %p298 = scmp.lt.s32.totalorder %s27, 1
        %s299 = scalar_select %p298, %s27, 1
        %p300 = scmp.lt.s32.totalorder %s28, 0
        %s301 = scalar_select %p300, %s28, 0
        %s302 = smul.addr %s301, 4
        %s303 = smul.addr %s299, 4
        %s304 = sadd.s32 %s302, %s303
        %s305 = scalar_lea.vmem %s3, %s304
        %p306 = pneg %p180
        %p307 = pneg %p177
        %p308 = scmp.lt.s32.totalorder %s27, 1
        %s309 = scalar_select %p308, %s27, 1
        %p310 = scmp.lt.s32.totalorder %s28, 0
        %s311 = scalar_select %p310, %s28, 0
        %s312 = smul.addr %s311, 4
        %s313 = smul.addr %s309, 4
        %s314 = sadd.s32 %s312, %s313
        %s315 = scalar_lea.vmem %s4, %s314
        %s316 = sadd.s32 %s28, %s29
        %s317 = sadd.s32 %s28, %s29
        %p318 = scmp.lt.s32.totalorder %s27, 1
        %s319 = scalar_select %p318, %s27, 1
        %p320 = scmp.lt.s32.totalorder %s28, 0
        %s321 = scalar_select %p320, %s28, 0
        %s322 = sadd.s32 %s321, %s319
        %s323 = scalar_lea.vmem %s2, %s322
        %p324 = scmp.lt.s32.totalorder %s27, 1
        %s325 = scalar_select %p324, %s27, 1
        %p326 = scmp.lt.s32.totalorder %s28, 0
        %s327 = scalar_select %p326, %s28, 0
        %s328 = smul.addr %s327, 4
        %s329 = smul.addr %s325, 4
        %s330 = sadd.s32 %s328, %s329
        %s331 = scalar_lea.vmem %s3, %s330
        %p332 = scmp.lt.s32.totalorder %s27, 1
        %s333 = scalar_select %p332, %s27, 1
        %p334 = scmp.lt.s32.totalorder %s28, 0
        %s335 = scalar_select %p334, %s28, 0
        %s336 = smul.addr %s335, 4
        %s337 = smul.addr %s333, 4
        %s338 = sadd.s32 %s336, %s337
        %s339 = scalar_lea.vmem %s4, %s338
        %p340 = scmp.eq.s32.totalorder %s29, 0
        // Predicated region
        $region37: #{tpu_custom_call.1} parent=27 // pred_check
          %p341 = pneg %p340
        $region38: #{tpu_custom_call.1} parent=27 // pred_check_branch
          %343 = sbr.rel (%p341) target = $region40
        $region39: #{tpu_custom_call.1} parent=27 // pred_region
          %344 = vst [vmem:[#allocation2] sm:$0xff] 0.0
          %345 = vst [vmem:[#allocation3] sm:$0xff] 0.0
          %346 = vst [vmem:[#allocation3 + $0x8] sm:$0xff] 0.0
          %347 = vst [vmem:[#allocation3 + $0x10] sm:$0xff] 0.0
          %348 = vst [vmem:[#allocation3 + $0x18] sm:$0xff] 0.0
          %349 = vst [vmem:[#allocation4] sm:$0xff] 0.0
          %350 = vst [vmem:[#allocation4 + $0x8] sm:$0xff] 0.0
          %351 = vst [vmem:[#allocation4 + $0x10] sm:$0xff] 0.0
          %352 = vst [vmem:[#allocation4 + $0x18] sm:$0xff] 0.0
        $region40: #{tpu_custom_call.1} parent=27 // pred_fallthru
          _
        %v353 = vld [vmem:[%s258] sm:$0xff]
        %v354 = vld [vmem:[%s258 + $0x8] sm:$0xff]
        %v355 = vld [vmem:[%s258 + $0x10] sm:$0xff]
        %v356 = vld [vmem:[%s258 + $0x18] sm:$0xff]
        %v357 = vld [vmem:[%s268] sm:$0xff]
        %v358 = vld [vmem:[%s268 + $0x8] sm:$0xff]
        %v359 = vld [vmem:[%s268 + $0x10] sm:$0xff]
        %v360 = vld [vmem:[%s268 + $0x18] sm:$0xff]
        %v361 = vmax.f32 %v353, %v354
        %v362 = vmax.f32 %v355, %v356
        %v363 = vmax.f32 %v361, %v362
        %v364 = vsub.f32 %v353, %v363
        %v365 = vsub.f32 %v354, %v363
        %v366 = vsub.f32 %v355, %v363
        %v367 = vsub.f32 %v356, %v363
        %v368 = vmul.f32 %v364, 1.442695
        %v369 = vpow.pop %v368
        %v370 = vmul.f32 %v365, 1.442695
        %v371 = vpow.pop %v370
        %v372 = vmul.f32 %v366, 1.442695
        %v373 = vpow.pop %v372
        %v374 = vmul.f32 %v367, 1.442695
        %v375 = vpow.pop %v374
        %v376 = vadd.f32 %v369, %v371
        %v377 = vadd.f32 %v376, %v373
        %v378 = vadd.f32 %v377, %v375
        %v379 = vrcp.pop %v378
        %v380 = vmul.f32 %v378, %v379
        %v381 = vsub.f32 1.0, %v380
        %v382 = vmul.f32 %v379, %v381
        %v383 = vadd.f32 %v379, %v382
        %vm384 = vweird.f32 %v378
        %vm385 = vweird.f32 %v379
        %vm386 = vmor %vm384, %vm385
        %v387 = vsel %vm386, %v379, %v383
        %v388 = vand.u32 2147483647, %v378
        %vm389 = vcmp.eq.f32.partialorder %v388, 8.507059e+37
        %v390 = vand.u32 %v378, 2147483648
        %v391 = vor.u32 1.1754944e-38, %v390
        %v392 = vsel %vm389, %v391, %v387
        %v393 = vlog2.pop %v378
        %v394 = vmul.f32 %v393, 0.6931472
        %v395 = vmul.f32 %v369, %v392
        %v396 = vmul.f32 %v371, %v392
        %v397 = vmul.f32 %v373, %v392
        %v398 = vmul.f32 %v375, %v392
        %s399 = sadd.s32 %s28, %s29
        %s400 = smul.u32 %s399, 8
        %v401 = vlaneseq
        %v402 = vshrl.u32 %v401, 7
        %v403 = vlaneseq
        %v404 = vand.u32 %v403, 127
        %v405 = vstv %s400
        %v406 = vadd.s32 %v405, %v402
        %v407 = vmul.u32 %v406, 128
        %v408 = vadd.s32 %v407, %v404
        %vm409 = vcmp.lt.s32.totalorder %v408, 256
        %v410 = vsel %vm409, 1, 0
        %v411 = vcvt.s32.f32 %v410
        %v412 = vmul.f32 %v395, %v411
        %v413 = vmul.f32 %v396, %v411
        %v414 = vmul.f32 %v397, %v411
        %v415 = vmul.f32 %v398, %v411
        %v416 = vadd.f32 %v357, %v358
        %v417 = vadd.f32 %v416, %v359
        %v418 = vadd.f32 %v417, %v360
        %v419 = vld [vmem:[#allocation2] sm:$0xff]
        %v420 = vmul.f32 %v418, %v394
        %v421 = vmul.f32 %v357, %v364
        %v422 = vmul.f32 %v358, %v365
        %v423 = vmul.f32 %v359, %v366
        %v424 = vmul.f32 %v360, %v367
        %v425 = vadd.f32 %v421, %v422
        %v426 = vadd.f32 %v425, %v423
        %v427 = vadd.f32 %v426, %v424
        %v428 = vsub.f32 %v420, %v427
        %v429 = vadd.f32 %v419, %v428
        %430 = vst [vmem:[#allocation2] sm:$0xff] %v429
        %v431 = vld [vmem:[#allocation3] sm:$0xff]
        %v432 = vld [vmem:[#allocation3 + $0x8] sm:$0xff]
        %v433 = vld [vmem:[#allocation3 + $0x10] sm:$0xff]
        %v434 = vld [vmem:[#allocation3 + $0x18] sm:$0xff]
        %v435 = vmul.f32 %v412, %v357
        %v436 = vmul.f32 %v413, %v358
        %v437 = vmul.f32 %v414, %v359
        %v438 = vmul.f32 %v415, %v360
        %v439 = vadd.f32 %v431, %v435
        %v440 = vadd.f32 %v432, %v436
        %v441 = vadd.f32 %v433, %v437
        %v442 = vadd.f32 %v434, %v438
        %443 = vst [vmem:[#allocation3] sm:$0xff] %v439
        %444 = vst [vmem:[#allocation3 + $0x8] sm:$0xff] %v440
        %445 = vst [vmem:[#allocation3 + $0x10] sm:$0xff] %v441
        %446 = vst [vmem:[#allocation3 + $0x18] sm:$0xff] %v442
        %v447 = vld [vmem:[#allocation4] sm:$0xff]
        %v448 = vld [vmem:[#allocation4 + $0x8] sm:$0xff]
        %v449 = vld [vmem:[#allocation4 + $0x10] sm:$0xff]
        %v450 = vld [vmem:[#allocation4 + $0x18] sm:$0xff]
        %v451 = vadd.f32 %v412, %v357
        %v452 = vadd.f32 %v413, %v358
        %v453 = vadd.f32 %v414, %v359
        %v454 = vadd.f32 %v415, %v360
        %v455 = vadd.f32 %v447, %v451
        %v456 = vadd.f32 %v448, %v452
        %v457 = vadd.f32 %v449, %v453
        %v458 = vadd.f32 %v450, %v454
        %459 = vst [vmem:[#allocation4] sm:$0xff] %v455
        %460 = vst [vmem:[#allocation4 + $0x8] sm:$0xff] %v456
        %461 = vst [vmem:[#allocation4 + $0x10] sm:$0xff] %v457
        %462 = vst [vmem:[#allocation4 + $0x18] sm:$0xff] %v458
        // Predicated region
        $region41: #{tpu_custom_call.1} parent=27 // pred_check
          %p463 = pneg %p340
        $region42: #{tpu_custom_call.1} parent=27 // pred_check_branch
          %465 = sbr.rel (%p463) target = $region44
        $region43: #{tpu_custom_call.1} parent=27 // pred_region
          %v466 = vld [vmem:[#allocation2] sm:$0xff]
          %467 = vadd.xlane.f32.xlu0 %v466
          %v468 = vpop.xlane.xlu0 %467
          %v469 = vrot.slane %v468, 4
          %v470 = vadd.f32 %v468, %v469
          %v471 = vrot.slane %v470, 2
          %v472 = vadd.f32 %v470, %v471
          %v473 = vrot.slane %v472, 1
          %v474 = vadd.f32 %v472, %v473
          %s475 = vtos %v474
          %v476 = vstv %s475
          %vm477 = vcmask 0
          %478 = vst.msk [vmem:[%s323] sm:$0x1] %vm477, %v476
          %v479 = vld [vmem:[#allocation3] sm:$0xff]
          %v480 = vld [vmem:[#allocation3 + $0x8] sm:$0xff]
          %v481 = vld [vmem:[#allocation3 + $0x10] sm:$0xff]
          %v482 = vld [vmem:[#allocation3 + $0x18] sm:$0xff]
          %483 = vadd.xlane.f32.xlu0 %v479
          %v484 = vpop.xlane.xlu0 %483
          %485 = vadd.xlane.f32.xlu0 %v480
          %v486 = vpop.xlane.xlu0 %485
          %487 = vadd.xlane.f32.xlu0 %v481
          %v488 = vpop.xlane.xlu0 %487
          %489 = vadd.xlane.f32.xlu0 %v482
          %v490 = vpop.xlane.xlu0 %489
          %v491 = vrot.slane %v484, 4
          %v492 = vadd.f32 %v484, %v491
          %v493 = vrot.slane %v492, 2
          %v494 = vadd.f32 %v492, %v493
          %v495 = vrot.slane %v494, 1
          %v496 = vadd.f32 %v494, %v495
          %v497 = vrot.slane %v486, 4
          %v498 = vadd.f32 %v486, %v497
          %v499 = vrot.slane %v498, 2
          %v500 = vadd.f32 %v498, %v499
          %v501 = vrot.slane %v500, 1
          %v502 = vadd.f32 %v500, %v501
          %v503 = vrot.slane %v488, 4
          %v504 = vadd.f32 %v488, %v503
          %v505 = vrot.slane %v504, 2
          %v506 = vadd.f32 %v504, %v505
          %v507 = vrot.slane %v506, 1
          %v508 = vadd.f32 %v506, %v507
          %v509 = vrot.slane %v490, 4
          %v510 = vadd.f32 %v490, %v509
          %v511 = vrot.slane %v510, 2
          %v512 = vadd.f32 %v510, %v511
          %v513 = vrot.slane %v512, 1
          %v514 = vadd.f32 %v512, %v513
          %515 = vst.msk [vmem:[%s331] sm:$0x1] %vm477, %v496
          %516 = vst.msk [vmem:[%s331 + $0x1] sm:$0x1] %vm477, %v502
          %517 = vst.msk [vmem:[%s331 + $0x2] sm:$0x1] %vm477, %v508
          %518 = vst.msk [vmem:[%s331 + $0x3] sm:$0x1] %vm477, %v514
          %v519 = vld [vmem:[#allocation4] sm:$0xff]
          %v520 = vld [vmem:[#allocation4 + $0x8] sm:$0xff]
          %v521 = vld [vmem:[#allocation4 + $0x10] sm:$0xff]
          %v522 = vld [vmem:[#allocation4 + $0x18] sm:$0xff]
          %523 = vadd.xlane.f32.xlu0 %v519
          %v524 = vpop.xlane.xlu0 %523
          %525 = vadd.xlane.f32.xlu0 %v520
          %v526 = vpop.xlane.xlu0 %525
          %527 = vadd.xlane.f32.xlu0 %v521
          %v528 = vpop.xlane.xlu0 %527
          %529 = vadd.xlane.f32.xlu0 %v522
          %v530 = vpop.xlane.xlu0 %529
          %v531 = vrot.slane %v524, 4
          %v532 = vadd.f32 %v524, %v531
          %v533 = vrot.slane %v532, 2
          %v534 = vadd.f32 %v532, %v533
          %v535 = vrot.slane %v534, 1
          %v536 = vadd.f32 %v534, %v535
          %v537 = vrot.slane %v526, 4
          %v538 = vadd.f32 %v526, %v537
          %v539 = vrot.slane %v538, 2
          %v540 = vadd.f32 %v538, %v539
          %v541 = vrot.slane %v540, 1
          %v542 = vadd.f32 %v540, %v541
          %v543 = vrot.slane %v528, 4
          %v544 = vadd.f32 %v528, %v543
          %v545 = vrot.slane %v544, 2
          %v546 = vadd.f32 %v544, %v545
          %v547 = vrot.slane %v546, 1
          %v548 = vadd.f32 %v546, %v547
          %v549 = vrot.slane %v530, 4
          %v550 = vadd.f32 %v530, %v549
          %v551 = vrot.slane %v550, 2
          %v552 = vadd.f32 %v550, %v551
          %v553 = vrot.slane %v552, 1
          %v554 = vadd.f32 %v552, %v553
          %555 = vst.msk [vmem:[%s339] sm:$0x1] %vm477, %v536
          %556 = vst.msk [vmem:[%s339 + $0x1] sm:$0x1] %vm477, %v542
          %557 = vst.msk [vmem:[%s339 + $0x2] sm:$0x1] %vm477, %v548
          %558 = vst.msk [vmem:[%s339 + $0x3] sm:$0x1] %vm477, %v554
        $region44: #{tpu_custom_call.1} parent=27 // pred_fallthru
          _
        %p559 = scmp.lt.s32.totalorder %s27, 1
        %s560 = scalar_select %p559, %s27, 1
        %p561 = scmp.lt.s32.totalorder %s28, 0
        %s562 = scalar_select %p561, %s28, 0
        %s563 = sadd.s32 %s562, %s560
        %s564 = scalar_lea.vmem %s2, %s563
        %p565 = scmp.lt.s32.totalorder %s27, 1
        %s566 = scalar_select %p565, %s27, 1
        %p567 = scmp.lt.s32.totalorder %s28, 0
        %s568 = scalar_select %p567, %s28, 0
        %s569 = smul.addr %s568, 4
        %s570 = smul.addr %s566, 4
        %s571 = sadd.s32 %s569, %s570
        %s572 = scalar_lea.vmem %s3, %s571
        %p573 = scmp.lt.s32.totalorder %s27, 1
        %s574 = scalar_select %p573, %s27, 1
        %p575 = scmp.lt.s32.totalorder %s28, 0
        %s576 = scalar_select %p575, %s28, 0
        %s577 = smul.addr %s576, 4
        %s578 = smul.addr %s574, 4
        %s579 = sadd.s32 %s577, %s578
        %s580 = scalar_lea.vmem %s4, %s579
        // Predicated region
        $region45: #{tpu_custom_call.1} parent=27 // pred_check
          %p581 = pneg %p121
        $region46: #{tpu_custom_call.1} parent=27 // pred_check_branch
          %583 = sbr.rel (%p581) target = $region48
        $region47: #{tpu_custom_call.1} parent=27 // pred_region
          _
        $region48: #{tpu_custom_call.1} parent=27 // pred_fallthru
          _
        // Predicated region
        $region49: #{tpu_custom_call.1} parent=27 // pred_check
          %p584 = pneg %p149
        $region50: #{tpu_custom_call.1} parent=27 // pred_check_branch
          %586 = sbr.rel (%p584) target = $region52
        $region51: #{tpu_custom_call.1} parent=27 // pred_region
          _
        $region52: #{tpu_custom_call.1} parent=27 // pred_fallthru
          _
        // Predicated region
        $region53: #{tpu_custom_call.1} parent=27 // pred_check
          %p587 = pneg %p177
        $region54: #{tpu_custom_call.1} parent=27 // pred_check_branch
          %589 = sbr.rel (%p587) target = $region56
        $region55: #{tpu_custom_call.1} parent=27 // pred_region
          _
        $region56: #{tpu_custom_call.1} parent=27 // pred_fallthru
          _
      $region28: #{tpu_custom_call.1} parent=5 // pred_fallthru
        _
      %p590 = scmp.le.s32.totalorder 2, %s17
      // Predicated region
      $region57: #{tpu_custom_call.1} parent=5 // pred_check
        %p591 = pneg %p590
      $region58: #{tpu_custom_call.1} parent=5 // pred_check_branch
        %593 = sbr.rel (%p591) target = $region60
      $region59: #{tpu_custom_call.1} parent=5 // pred_region
        %s594 = ssub.s32 %s17, 2
        // Predicated region
        $region61: #{tpu_custom_call.1} parent=59 // pred_check
          %p595 = pneg %p127
        $region62: #{tpu_custom_call.1} parent=59 // pred_check_branch
          %597 = sbr.rel (%p595) target = $region64
        $region63: #{tpu_custom_call.1} parent=59 // pred_region
          %p598 = scmp.lt.s32.totalorder %s30, 1
          %s599 = scalar_select %p598, %s30, 1
          %p600 = scmp.lt.s32.totalorder %s31, 0
          %s601 = scalar_select %p600, %s31, 0
          %s602 = sadd.s32 %s601, %s599
          %s603 = scalar_lea.vmem %s2, %s602
        $region64: #{tpu_custom_call.1} parent=59 // pred_fallthru
          _
        // Predicated region
        $region65: #{tpu_custom_call.1} parent=59 // pred_check
          %p604 = pneg %p155
        $region66: #{tpu_custom_call.1} parent=59 // pred_check_branch
          %606 = sbr.rel (%p604) target = $region68
        $region67: #{tpu_custom_call.1} parent=59 // pred_region
          %p607 = scmp.lt.s32.totalorder %s30, 1
          %s608 = scalar_select %p607, %s30, 1
          %p609 = scmp.lt.s32.totalorder %s31, 0
          %s610 = scalar_select %p609, %s31, 0
          %s611 = smul.addr %s610, 4
          %s612 = smul.addr %s608, 4
          %s613 = sadd.s32 %s611, %s612
          %s614 = scalar_lea.vmem %s3, %s613
        $region68: #{tpu_custom_call.1} parent=59 // pred_fallthru
          _
        // Predicated region
        $region69: #{tpu_custom_call.1} parent=59 // pred_check
          %p615 = pneg %p183
        $region70: #{tpu_custom_call.1} parent=59 // pred_check_branch
          %617 = sbr.rel (%p615) target = $region72
        $region71: #{tpu_custom_call.1} parent=59 // pred_region
          %p618 = scmp.lt.s32.totalorder %s30, 1
          %s619 = scalar_select %p618, %s30, 1
          %p620 = scmp.lt.s32.totalorder %s31, 0
          %s621 = scalar_select %p620, %s31, 0
          %s622 = smul.addr %s621, 4
          %s623 = smul.addr %s619, 4
          %s624 = sadd.s32 %s622, %s623
          %s625 = scalar_lea.vmem %s4, %s624
        $region72: #{tpu_custom_call.1} parent=59 // pred_fallthru
          _
      $region60: #{tpu_custom_call.1} parent=5 // pred_fallthru
        _
    $region6: #{tpu_custom_call.1} parent=1 // loop_footer
      %s21 = sadd.s32 1, %s17
    $region7: #{tpu_custom_call.1} parent=1 // loop_footer_branch
      %16 = sbr.rel target = $region3
    $region8: #{tpu_custom_call.1} parent=1 // loop_exit
      _
    %626 = vsyncpa [#allocation6], 1
    %s627 = scalar_lea.sflag [#allocation6], 1
    %628 = vsyncpa %s627, 1
    %629 = vsyncpa [#allocation8], 1
    %s630 = scalar_lea.sflag [#allocation8], 1
    %631 = vsyncpa %s630, 1

</llo_original>
